<compile_context>
chip_gen: v7x
topology: tpu7x:2x2x1
jax: 0.10.0
libtpu: 0.0.40
codegen_flags: <defaults>
</compile_context>

<pallas_src>
import jax
import jax.numpy as jnp
from jax.experimental import pallas as pl
from jax.experimental.pallas import tpu as pltpu

IN_FEATURES = 10
HIDDEN = 32
OUT_FEATURES = 5
OUT_PAD = 128  # lane-dense padded output width (multiple of 128 lanes)


def _round_up(x, m):
    return (x + m - 1) // m * m


def mlp_kernel(x_ref, w1_ref, b1_ref, w2_ref, b2_ref, o_ref):
    # x_ref: [TILE_B, 10] (compute dtype); w1: [10, 32]; w2: [32, 128] (padded).
    x = x_ref[...]
    # MXU matmul, f32 accumulation; bias add + ReLU in f32 on the VPU.
    h = jnp.dot(x, w1_ref[...], preferred_element_type=jnp.float32) + b1_ref[...]
    h = jnp.maximum(h, 0.0)
    y = jnp.dot(h.astype(w2_ref.dtype), w2_ref[...],
                preferred_element_type=jnp.float32) + b2_ref[...]
    o_ref[...] = y.astype(o_ref.dtype)  # lane-dense [TILE_B, 128] store


def toy_model_forward(x, w1, b1, w2, b2, *, tile_b=512,
                      compute_dtype=jnp.bfloat16):
    """y = relu(x @ w1 + b1) @ w2 + b2 ; x: [B, 10] f32 -> [B, 5] f32."""
    B = x.shape[0]

    # --- choose batch tile & pad B so the grid divides evenly ----------------
    tile_b = max(8, min(tile_b, _round_up(B, 8)))
    B_pad = _round_up(B, tile_b)
    if B_pad != B:
        x = jnp.pad(x, ((0, B_pad - B), (0, 0)))

    # --- lane-dense output: pad out_proj to 128 lanes -------------------------
    w2p = jnp.pad(w2, ((0, 0), (0, OUT_PAD - w2.shape[1])))
    b2p = jnp.pad(b2, ((0, 0), (0, OUT_PAD - b2.shape[1])))

    # --- bf16 (default) MXU operands; biases / accumulation stay f32 ----------
    xc = x.astype(compute_dtype)
    w1c = w1.astype(compute_dtype)
    w2c = w2p.astype(compute_dtype)
    b1f = b1.astype(jnp.float32)
    b2f = b2p.astype(jnp.float32)

    grid = (B_pad // tile_b,)
    flops = 2 * B_pad * (IN_FEATURES * HIDDEN + HIDDEN * OUT_PAD)
    bytes_accessed = (xc.size * xc.dtype.itemsize
                      + w1c.size * w1c.dtype.itemsize
                      + w2c.size * w2c.dtype.itemsize
                      + b1f.size * 4 + b2f.size * 4
                      + B_pad * OUT_PAD * 4)

    out_padded = pl.pallas_call(
        mlp_kernel,
        out_shape=jax.ShapeDtypeStruct((B_pad, OUT_PAD), jnp.float32),
        grid_spec=pltpu.PrefetchScalarGridSpec(
            num_scalar_prefetch=0,
            grid=grid,
            in_specs=[
                # x tile: streamed (double-buffered) over the batch grid.
                pl.BlockSpec((tile_b, IN_FEATURES), lambda i: (i, 0)),
                # Weights / biases: constant block index -> fetched once, resident.
                pl.BlockSpec((IN_FEATURES, HIDDEN), lambda i: (0, 0)),
                pl.BlockSpec((1, HIDDEN), lambda i: (0, 0)),
                pl.BlockSpec((HIDDEN, OUT_PAD), lambda i: (0, 0)),
                pl.BlockSpec((1, OUT_PAD), lambda i: (0, 0)),
            ],
            out_specs=pl.BlockSpec((tile_b, OUT_PAD), lambda i: (i, 0)),
        ),
        compiler_params=pltpu.CompilerParams(
            # Batch tiles are independent: shard across both TCs on v7x.
            dimension_semantics=("parallel",),
        ),
        cost_estimate=pl.CostEstimate(flops=flops, transcendentals=0,
                                      bytes_accessed=bytes_accessed),
    )(xc, w1c, b1f, w2c, b2f)

    # Undo batch padding and the lane padding of the output projection.
    return out_padded[:B, :OUT_FEATURES]


def init_params(key):
    """Deterministic init mirroring nn.Linear's default (uniform +/- 1/sqrt(fan_in))."""
    k1, k2, k3, k4 = jax.random.split(key, 4)
    bound1 = 1.0 / jnp.sqrt(IN_FEATURES)
    bound2 = 1.0 / jnp.sqrt(HIDDEN)
    # Stored as [in, out] (transpose of PyTorch's [out, in]).
    w1 = jax.random.uniform(k1, (IN_FEATURES, HIDDEN), jnp.float32, -bound1, bound1)
    b1 = jax.random.uniform(k2, (1, HIDDEN), jnp.float32, -bound1, bound1)
    w2 = jax.random.uniform(k3, (HIDDEN, OUT_FEATURES), jnp.float32, -bound2, bound2)
    b2 = jax.random.uniform(k4, (1, OUT_FEATURES), jnp.float32, -bound2, bound2)
    return w1, b1, w2, b2


if __name__ == "__main__":
    key = jax.random.PRNGKey(0)
    k_x, k_p = jax.random.split(key)
    w1, b1, w2, b2 = init_params(k_p)

    # --- small batch, exact f32 path (tight tolerance) -----------------------
    B = 8
    x = jax.random.normal(k_x, (B, IN_FEATURES), jnp.float32)
    ref = jnp.maximum(x @ w1 + b1, 0.0) @ w2 + b2

    out_f32 = jax.block_until_ready(
        toy_model_forward(x, w1, b1, w2, b2, tile_b=8, compute_dtype=jnp.float32))
    assert out_f32.shape == (B, OUT_FEATURES)
    assert jnp.allclose(out_f32, ref, atol=1e-5, rtol=1e-5)

    # --- bf16 fast path (halved HBM traffic on v6e/v7x), f32 accumulate ------
    out_bf16 = jax.block_until_ready(toy_model_forward(x, w1, b1, w2, b2, tile_b=8))
    assert jnp.allclose(out_bf16, ref, atol=5e-2, rtol=5e-2)

    # --- ragged batch: exercises the batch grid + padding path ---------------
    B2 = 200
    x2 = jax.random.normal(k_x, (B2, IN_FEATURES), jnp.float32)
    ref2 = jnp.maximum(x2 @ w1 + b1, 0.0) @ w2 + b2
    out2 = jax.block_until_ready(toy_model_forward(x2, w1, b1, w2, b2, tile_b=64))
    assert out2.shape == (B2, OUT_FEATURES)
    assert jnp.allclose(out2, ref2, atol=5e-2, rtol=5e-2)

    print("KERNEL_OK")
</pallas_src>

<mosaic_0001>
module attributes {stable_mosaic.version = 11 : i64} {
  func.func @mlp_kernel(%arg0: i32, %arg1: memref<8x10xf32, #tpu.memory_space<vmem>>, %arg2: memref<10x32xf32, #tpu.memory_space<vmem>>, %arg3: memref<1x32xf32, #tpu.memory_space<vmem>>, %arg4: memref<32x128xf32, #tpu.memory_space<vmem>>, %arg5: memref<1x128xf32, #tpu.memory_space<vmem>>, %arg6: memref<8x128xf32, #tpu.memory_space<vmem>>) attributes {dimension_semantics = [#tpu.dimension_semantics<parallel>], iteration_bounds = array<i64: 1>, scalar_prefetch = 0 : i64, scratch_operands = 0 : i64, tpu.core_type = #tpu.core_type<tc>, window_params = [{transform_indices = @transform_0, window_bounds = array<i64: 8, 10>}, {pipeline_mode = #tpu.pipeline_mode<synchronous>, transform_indices = @transform_1, window_bounds = array<i64: 10, 32>}, {pipeline_mode = #tpu.pipeline_mode<synchronous>, transform_indices = @transform_2, window_bounds = array<i64: 1, 32>}, {pipeline_mode = #tpu.pipeline_mode<synchronous>, transform_indices = @transform_3, window_bounds = array<i64: 32, 128>}, {pipeline_mode = #tpu.pipeline_mode<synchronous>, transform_indices = @transform_4, window_bounds = array<i64: 1, 128>}, {transform_indices = @transform_5, window_bounds = array<i64: 8, 128>}]} {
    %c0 = arith.constant 0 : index
    %c0_0 = arith.constant 0 : index
    %0 = vector.load %arg1[%c0, %c0_0] : memref<8x10xf32, #tpu.memory_space<vmem>>, vector<8x10xf32>
    %c0_1 = arith.constant 0 : index
    %c0_2 = arith.constant 0 : index
    %1 = vector.load %arg2[%c0_1, %c0_2] : memref<10x32xf32, #tpu.memory_space<vmem>>, vector<10x32xf32>
    %cst = arith.constant dense<0.000000e+00> : vector<8x32xf32>
    %2 = tpu.matmul %0, %1, %cst {dimension_numbers = #tpu.dot_dimension_numbers<[1], [0], [0], [1], [0, 0, 1, 1], [], []>} : vector<8x10xf32>, vector<10x32xf32>, vector<8x32xf32> -> vector<8x32xf32>
    %c0_3 = arith.constant 0 : index
    %c0_4 = arith.constant 0 : index
    %3 = vector.load %arg3[%c0_3, %c0_4] : memref<1x32xf32, #tpu.memory_space<vmem>>, vector<1x32xf32>
    %4 = vector.broadcast %3 : vector<1x32xf32> to vector<8x32xf32>
    %5 = arith.addf %2, %4 : vector<8x32xf32>
    %cst_5 = arith.constant 0.000000e+00 : f32
    %6 = vector.broadcast %cst_5 : f32 to vector<8x32xf32>
    %7 = arith.maximumf %5, %6 : vector<8x32xf32>
    %c0_6 = arith.constant 0 : index
    %c0_7 = arith.constant 0 : index
    %8 = vector.load %arg4[%c0_6, %c0_7] : memref<32x128xf32, #tpu.memory_space<vmem>>, vector<32x128xf32>
    %cst_8 = arith.constant dense<0.000000e+00> : vector<8x128xf32>
    %9 = tpu.matmul %7, %8, %cst_8 {dimension_numbers = #tpu.dot_dimension_numbers<[1], [0], [0], [1], [0, 0, 1, 1], [], []>} : vector<8x32xf32>, vector<32x128xf32>, vector<8x128xf32> -> vector<8x128xf32>
    %c0_9 = arith.constant 0 : index
    %c0_10 = arith.constant 0 : index
    %10 = vector.load %arg5[%c0_9, %c0_10] : memref<1x128xf32, #tpu.memory_space<vmem>>, vector<1x128xf32>
    %11 = vector.broadcast %10 : vector<1x128xf32> to vector<8x128xf32>
    %12 = arith.addf %9, %11 : vector<8x128xf32>
    %c0_11 = arith.constant 0 : index
    %c0_12 = arith.constant 0 : index
    %13 = vector.load %arg6[%c0_11, %c0_12] : memref<8x128xf32, #tpu.memory_space<vmem>>, vector<8x128xf32>
    tpu.vector_store %arg6[%c0_11, %c0_12], %12 {strides = array<i32>} : memref<8x128xf32, #tpu.memory_space<vmem>>, vector<8x128xf32>,
    return
  }
  func.func @transform_0(%arg0: i32) -> (i32, i32) {
    %c0_i32 = arith.constant 0 : i32
    %c0_i32_0 = arith.constant 0 : i32
    return %arg0, %c0_i32 : i32, i32
  }
  func.func @transform_1(%arg0: i32) -> (i32, i32) {
    %c0_i32 = arith.constant 0 : i32
    %c0_i32_0 = arith.constant 0 : i32
    %c0_i32_1 = arith.constant 0 : i32
    return %c0_i32, %c0_i32_0 : i32, i32
  }
  func.func @transform_2(%arg0: i32) -> (i32, i32) {
    %c0_i32 = arith.constant 0 : i32
    %c0_i32_0 = arith.constant 0 : i32
    %c0_i32_1 = arith.constant 0 : i32
    return %c0_i32, %c0_i32_0 : i32, i32
  }
  func.func @transform_3(%arg0: i32) -> (i32, i32) {
    %c0_i32 = arith.constant 0 : i32
    %c0_i32_0 = arith.constant 0 : i32
    %c0_i32_1 = arith.constant 0 : i32
    return %c0_i32, %c0_i32_0 : i32, i32
  }
  func.func @transform_4(%arg0: i32) -> (i32, i32) {
    %c0_i32 = arith.constant 0 : i32
    %c0_i32_0 = arith.constant 0 : i32
    %c0_i32_1 = arith.constant 0 : i32
    return %c0_i32, %c0_i32_0 : i32, i32
  }
  func.func @transform_5(%arg0: i32) -> (i32, i32) {
    %c0_i32 = arith.constant 0 : i32
    %c0_i32_0 = arith.constant 0 : i32
    return %arg0, %c0_i32 : i32, i32
  }
}

</mosaic_0001>

<llo_original>
// kernel: tpu_custom_call.1
$region0: #{tpu_custom_call.1}
  #allocation0 [shape = 'u32[]', space=smem, size = 0x4, offset = 0x4, fixed_abs, tag = 'smem constant byte address 0x4 - core index']
  #allocation1 [shape = 'u32[144,128]{1,0:T(1,128)}', space=vmem, size = 0x12000, scoped, tag = 'internal scratch']
  %s0 = inlined_call_operand.hbm [shape: f32[8,10], index: 0, kind: input, shape index: {}]
  %s1 = inlined_call_operand.hbm [shape: f32[10,32], index: 1, kind: input, shape index: {}]
  %s2 = inlined_call_operand.vmem [shape: f32[1,32], index: 2, kind: input, shape index: {}]
  %s3 = inlined_call_operand.hbm [shape: f32[32,128], index: 3, kind: input, shape index: {}]
  %s4 = inlined_call_operand.vmem [shape: f32[1,128], index: 4, kind: input, shape index: {}]
  %s5 = inlined_call_operand.hbm [shape: f32[8,128], index: 5, kind: output, shape index: {}]
  %s6 = sld [smem:[#allocation0]]
  $region42: #{tpu_custom_call.1} parent=0
    _
  %s8 = ssub.s32 1, %s6
  %s9 = scalar_select 0, %s8, %s6
  $region1: #{tpu_custom_call.1} parent=0
    #allocation2 [shape = 'u8[4096]{0}', space=vmem, size = 0x1000, scoped, tag = 'input window, operand 0, single buffered']
    #allocation3 [shape = 's32[1]{0}', space=sflag, size = 0x4, scoped, tag = 'scoped memory for tpu_custom_call.1']
    #allocation4 [shape = 's32[1]{0}', space=sflag, size = 0x4, scoped, tag = 'scoped memory for tpu_custom_call.1']
    #allocation5 [shape = 'u8[8192]{0}', space=vmem, size = 0x2000, scoped, tag = 'input window, operand 1, single buffered']
    #allocation6 [shape = 's32[1]{0}', space=sflag, size = 0x4, scoped, tag = 'scoped memory for tpu_custom_call.1']
    #allocation7 [shape = 'u8[16384]{0}', space=vmem, size = 0x4000, scoped, tag = 'input window, operand 3, single buffered']
    #allocation8 [shape = 'u8[4096]{0}', space=vmem, size = 0x1000, scoped, tag = 'output window, operand 0, single buffered']
    %10 = vsyncpa [#allocation3], 0
    %11 = vsyncpa [#allocation6], 0
    %12 = vsyncpa [#allocation4], 0
    // Predicated region
    $region2: #{tpu_custom_call.1} parent=1 // pred_check
      _
    $region3: #{tpu_custom_call.1} parent=1 // pred_check_branch
      %14 = sbr.rel (0) target = $region5
    $region4: #{tpu_custom_call.1} parent=1 // pred_region
      %s16 = ssub.s32 128, 128
      %17 = vsyncadd [#allocation3], %s16
      %s19 = sshll.u32 [#allocation2], 4
      %s20 = int_to_ptr.vmem [resolvable:$true] %s19
      %22 = dma.hbm_to_vmem [thread:$0]  %s0, 128, %s20, [#allocation3]
    $region5: #{tpu_custom_call.1} parent=1 // pred_fallthru
      _
    // Predicated region
    $region6: #{tpu_custom_call.1} parent=1 // pred_check
      _
    $region7: #{tpu_custom_call.1} parent=1 // pred_check_branch
      %24 = sbr.rel (0) target = $region9
    $region8: #{tpu_custom_call.1} parent=1 // pred_region
      %s26 = ssub.s32 256, 256
      %27 = vsyncadd [#allocation6], %s26
      %s28 = sshll.u32 [#allocation5], 4
      %s29 = int_to_ptr.vmem [resolvable:$true] %s28
      %34 = dma.hbm_to_vmem [thread:$0]  %s1, 256, %s29, [#allocation6], 128, 128, 8
    $region9: #{tpu_custom_call.1} parent=1 // pred_fallthru
      _
    // Predicated region
    $region10: #{tpu_custom_call.1} parent=1 // pred_check
      _
    $region11: #{tpu_custom_call.1} parent=1 // pred_check_branch
      %36 = sbr.rel (0) target = $region13
    $region12: #{tpu_custom_call.1} parent=1 // pred_region
      _
    $region13: #{tpu_custom_call.1} parent=1 // pred_fallthru
      _
    // Predicated region
    $region14: #{tpu_custom_call.1} parent=1 // pred_check
      _
    $region15: #{tpu_custom_call.1} parent=1 // pred_check_branch
      %38 = sbr.rel (0) target = $region17
    $region16: #{tpu_custom_call.1} parent=1 // pred_region
      %s40 = ssub.s32 512, 512
      %41 = vsyncadd [#allocation6], %s40
      %s42 = sshll.u32 [#allocation7], 4
      %s43 = int_to_ptr.vmem [resolvable:$true] %s42
      %48 = dma.hbm_to_vmem [thread:$0]  %s3, 512, %s43, [#allocation6], 128, 128, 8
    $region17: #{tpu_custom_call.1} parent=1 // pred_fallthru
      _
    // Predicated region
    $region18: #{tpu_custom_call.1} parent=1 // pred_check
      _
    $region19: #{tpu_custom_call.1} parent=1 // pred_check_branch
      %50 = sbr.rel (0) target = $region21
    $region20: #{tpu_custom_call.1} parent=1 // pred_region
      _
    $region21: #{tpu_custom_call.1} parent=1 // pred_fallthru
      _
    // Predicated region
    $region22: #{tpu_custom_call.1} parent=1 // pred_check
      _
    $region23: #{tpu_custom_call.1} parent=1 // pred_check_branch
      %52 = sbr.rel (0) target = $region25
    $region24: #{tpu_custom_call.1} parent=1 // pred_region
      %53 = dma.done [#allocation3], 128
    $region25: #{tpu_custom_call.1} parent=1 // pred_fallthru
      _
    // Predicated region
    $region26: #{tpu_custom_call.1} parent=1 // pred_check
      _
    $region27: #{tpu_custom_call.1} parent=1 // pred_check_branch
      %55 = sbr.rel (0) target = $region29
    $region28: #{tpu_custom_call.1} parent=1 // pred_region
      %56 = dma.done [#allocation6], 256
    $region29: #{tpu_custom_call.1} parent=1 // pred_fallthru
      _
    // Predicated region
    $region30: #{tpu_custom_call.1} parent=1 // pred_check
      _
    $region31: #{tpu_custom_call.1} parent=1 // pred_check_branch
      %58 = sbr.rel (0) target = $region33
    $region32: #{tpu_custom_call.1} parent=1 // pred_region
      %59 = dma.done [#allocation6], 512
    $region33: #{tpu_custom_call.1} parent=1 // pred_fallthru
      _
    %v60 = vld [vmem:[#allocation2] sm:$0xff]
    %v61 = vld [vmem:[#allocation5] sm:$0xff]
    %v62 = vld [vmem:[#allocation5 + $0x8] sm:$0x3]
    %v63 = vld [vmem:[%s2] sm:$0x1]
    %v65 = vlaneseq
    %v66 = vshrl.u32 %v65, 7
    %v67 = vsub.s32 0, %v66
    %v68 = vrot.slane %v63, %v67
    %vm70 = vcmask 80896
    %v72 = vsel %vm70, %v60, 0
    %vm74 = vcmask 1041408
    %v76 = vsel %vm74, %v62, 0
    %78 = vmatprep.subr.mxu0 0.0
    %79 = vmatpush1.msra.mxu0 %v61
    %80 = vmatprep.subr.mxu0 0.0
    %81 = vmatpush1.msra.mxu0 %v76
    %82 = vmatprep.subr.mxu0 0.0
    %83 = vmatpush1.msra.mxu0 0.0
    %84 = vmatprep.subr.mxu0 0.0
    %85 = vmatpush1.msra.mxu0 0.0
    %86 = vmatprep.subr.mxu0 0.0
    %87 = vmatpush1.msra.mxu0 0.0
    %88 = vmatprep.subr.mxu0 0.0
    %89 = vmatpush1.msra.mxu0 0.0
    %90 = vmatprep.subr.mxu0 0.0
    %91 = vmatpush1.msra.mxu0 0.0
    %92 = vmatprep.subr.mxu0 0.0
    %93 = vmatpush1.msra.mxu0 0.0
    %94 = vmatprep.subr.mxu0 0.0
    %95 = vmatpush1.msra.mxu0 0.0
    %96 = vmatprep.subr.mxu0 0.0
    %97 = vmatpush1.msra.mxu0 0.0
    %98 = vmatprep.subr.mxu0 0.0
    %99 = vmatpush1.msra.mxu0 0.0
    %100 = vmatprep.subr.mxu0 0.0
    %101 = vmatpush1.msra.mxu0 0.0
    %102 = vmatprep.subr.mxu0 0.0
    %103 = vmatpush1.msra.mxu0 0.0
    %104 = vmatprep.subr.mxu0 0.0
    %105 = vmatpush1.msra.mxu0 0.0
    %106 = vmatprep.subr.mxu0 0.0
    %107 = vmatpush1.msra.mxu0 0.0
    %108 = vmatprep.subr.mxu0 0.0
    %109 = vmatpush1.msra.mxu0 0.0
    %110 = vmatprep.subr.mxu0 0.0
    %111 = vmatpush1.msra.mxu0 0.0
    %112 = vmatprep.subr.mxu0 0.0
    %113 = vmatpush1.msra.mxu0 0.0
    %114 = vmatprep.subr.mxu0 0.0
    %115 = vmatpush1.msra.mxu0 0.0
    %116 = vmatprep.subr.mxu0 0.0
    %117 = vmatpush1.msra.mxu0 0.0
    %118 = vmatprep.subr.mxu0 0.0
    %119 = vmatpush1.msra.mxu0 0.0
    %120 = vmatprep.subr.mxu0 0.0
    %121 = vmatpush1.msra.mxu0 0.0
    %122 = vmatprep.subr.mxu0 0.0
    %123 = vmatpush1.msra.mxu0 0.0
    %124 = vmatprep.subr.mxu0 0.0
    %125 = vmatpush1.msra.mxu0 0.0
    %126 = vmatprep.subr.mxu0 0.0
    %127 = vmatpush1.msra.mxu0 0.0
    %128 = vmatprep.subr.mxu0 0.0
    %129 = vmatpush1.msra.mxu0 0.0
    %130 = vmatprep.subr.mxu0 0.0
    %131 = vmatpush1.msra.mxu0 0.0
    %132 = vmatprep.subr.mxu0 0.0
    %133 = vmatpush1.msra.mxu0 0.0
    %134 = vmatprep.subr.mxu0 0.0
    %135 = vmatpush1.msra.mxu0 0.0
    %136 = vmatprep.subr.mxu0 0.0
    %137 = vmatpush1.msra.mxu0 0.0
    %138 = vmatprep.subr.mxu0 0.0
    %139 = vmatpush1.msra.mxu0 0.0
    %140 = vmatprep.subr.mxu0 0.0
    %141 = vmatpush1.msra.mxu0 0.0
    %142 = vmatprep.mubr.f32.mxu0 0.0
    %143 = vmatmul.mubr.f32.gmra.mrb[0].mxu0 %v72
    %v144 = vpop.f32.mrb[0].mxu0
    %v145 = vadd.f32 %v68, %v144
    %v146 = vpop.f32.mrb[0].mxu0
    %147 = vdwg.mxu0
    %v148 = vmax.f32 %v145, 0.0
    %v149 = vld [vmem:[#allocation7] sm:$0xff]
    %v150 = vld [vmem:[#allocation7 + $0x8] sm:$0xff]
    %v151 = vld [vmem:[#allocation7 + $0x10] sm:$0xff]
    %v152 = vld [vmem:[#allocation7 + $0x18] sm:$0xff]
    %v153 = vld [vmem:[%s4] sm:$0x1]
    %v155 = vlaneseq
    %v156 = vshrl.u32 %v155, 7
    %v157 = vsub.s32 0, %v156
    %v158 = vrot.slane %v153, %v157
    %vm160 = vcmask 261120
    %v162 = vsel %vm160, %v148, 0
    %164 = vmatprep.subr.mxu0 0.0
    %165 = vmatpush1.msra.mxu0 %v149
    %166 = vmatprep.subr.mxu0 0.0
    %167 = vmatpush1.msra.mxu0 %v150
    %168 = vmatprep.subr.mxu0 0.0
    %169 = vmatpush1.msra.mxu0 %v151
    %170 = vmatprep.subr.mxu0 0.0
    %171 = vmatpush1.msra.mxu0 %v152
    %172 = vmatprep.subr.mxu0 0.0
    %173 = vmatpush1.msra.mxu0 0.0
    %174 = vmatprep.subr.mxu0 0.0
    %175 = vmatpush1.msra.mxu0 0.0
    %176 = vmatprep.subr.mxu0 0.0
    %177 = vmatpush1.msra.mxu0 0.0
    %178 = vmatprep.subr.mxu0 0.0
    %179 = vmatpush1.msra.mxu0 0.0
    %180 = vmatprep.subr.mxu0 0.0
    %181 = vmatpush1.msra.mxu0 0.0
    %182 = vmatprep.subr.mxu0 0.0
    %183 = vmatpush1.msra.mxu0 0.0
    %184 = vmatprep.subr.mxu0 0.0
    %185 = vmatpush1.msra.mxu0 0.0
    %186 = vmatprep.subr.mxu0 0.0
    %187 = vmatpush1.msra.mxu0 0.0
    %188 = vmatprep.subr.mxu0 0.0
    %189 = vmatpush1.msra.mxu0 0.0
    %190 = vmatprep.subr.mxu0 0.0
    %191 = vmatpush1.msra.mxu0 0.0
    %192 = vmatprep.subr.mxu0 0.0
    %193 = vmatpush1.msra.mxu0 0.0
    %194 = vmatprep.subr.mxu0 0.0
    %195 = vmatpush1.msra.mxu0 0.0
    %196 = vmatprep.subr.mxu0 0.0
    %197 = vmatpush1.msra.mxu0 0.0
    %198 = vmatprep.subr.mxu0 0.0
    %199 = vmatpush1.msra.mxu0 0.0
    %200 = vmatprep.subr.mxu0 0.0
    %201 = vmatpush1.msra.mxu0 0.0
    %202 = vmatprep.subr.mxu0 0.0
    %203 = vmatpush1.msra.mxu0 0.0
    %204 = vmatprep.subr.mxu0 0.0
    %205 = vmatpush1.msra.mxu0 0.0
    %206 = vmatprep.subr.mxu0 0.0
    %207 = vmatpush1.msra.mxu0 0.0
    %208 = vmatprep.subr.mxu0 0.0
    %209 = vmatpush1.msra.mxu0 0.0
    %210 = vmatprep.subr.mxu0 0.0
    %211 = vmatpush1.msra.mxu0 0.0
    %212 = vmatprep.subr.mxu0 0.0
    %213 = vmatpush1.msra.mxu0 0.0
    %214 = vmatprep.subr.mxu0 0.0
    %215 = vmatpush1.msra.mxu0 0.0
    %216 = vmatprep.subr.mxu0 0.0
    %217 = vmatpush1.msra.mxu0 0.0
    %218 = vmatprep.subr.mxu0 0.0
    %219 = vmatpush1.msra.mxu0 0.0
    %220 = vmatprep.subr.mxu0 0.0
    %221 = vmatpush1.msra.mxu0 0.0
    %222 = vmatprep.subr.mxu0 0.0
    %223 = vmatpush1.msra.mxu0 0.0
    %224 = vmatprep.subr.mxu0 0.0
    %225 = vmatpush1.msra.mxu0 0.0
    %226 = vmatprep.subr.mxu0 0.0
    %227 = vmatpush1.msra.mxu0 0.0
    %228 = vmatprep.mubr.f32.mxu0 0.0
    %229 = vmatmul.mubr.f32.gmra.mrb[0].mxu0 %v162
    %v230 = vpop.f32.mrb[0].mxu0
    %v231 = vadd.f32 %v158, %v230
    %v232 = vpop.f32.mrb[0].mxu0
    %233 = vdwg.mxu0
    %234 = vst [vmem:[#allocation8] sm:$0xff] %v231
    // Predicated region
    $region34: #{tpu_custom_call.1} parent=1 // pred_check
      _
    $region35: #{tpu_custom_call.1} parent=1 // pred_check_branch
      %236 = sbr.rel (0) target = $region37
    $region36: #{tpu_custom_call.1} parent=1 // pred_region
      %s238 = ssub.s32 128, 128
      %239 = vsyncadd [#allocation4], %s238
      %s241 = sshll.u32 [#allocation8], 4
      %s242 = int_to_ptr.vmem [resolvable:$true] %s241
      %244 = dma.vmem_to_hbm [thread:$0]  %s242, 128, %s5, [#allocation4]
    $region37: #{tpu_custom_call.1} parent=1 // pred_fallthru
      _
    // Predicated region
    $region38: #{tpu_custom_call.1} parent=1 // pred_check
      _
    $region39: #{tpu_custom_call.1} parent=1 // pred_check_branch
      %246 = sbr.rel (0) target = $region41
    $region40: #{tpu_custom_call.1} parent=1 // pred_region
      %247 = dma.done [#allocation4], 128
    $region41: #{tpu_custom_call.1} parent=1 // pred_fallthru
      _
    %248 = vsyncpa [#allocation3], 1
    %249 = vsyncpa [#allocation6], 1
    %250 = vsyncpa [#allocation4], 1

</llo_original>
